<compile_context>
chip_gen: v6e
topology: v6e:2x2x1
jax: 0.10.0
libtpu: 0.0.40
codegen_flags: <defaults>
</compile_context>

<pallas_src>
import functools

import jax
import jax.numpy as jnp
from jax.experimental import pallas as pl
from jax.experimental.pallas import tpu as pltpu


def _round_up(x: int, m: int) -> int:
    return (x + m - 1) // m * m


def _device_vmem_and_kind():
    """Best-effort generation detection: (vmem_capacity_bytes, device_kind)."""
    kind = ""
    try:
        kind = jax.devices()[0].device_kind.lower()
    except Exception:
        pass
    vmem_cap = None
    try:
        vmem_cap = int(pltpu.get_tpu_info().vmem_capacity_bytes)
    except Exception:
        vmem_cap = None
    if not vmem_cap or vmem_cap <= 0:
        vmem_cap = (64 if "v7" in kind else 128) * 1024 * 1024
    return vmem_cap, kind


# ---------------------------------------------------------------------------
# Fused kernel: grid = (n_stages, n_row_tiles); n_stages = n_layers GCNConv + 1 Linear
# ---------------------------------------------------------------------------
def _fused_gcn_kernel(a_ref, x0_ref, w_ref, b_ref, o_ref, *scratch,
                      tile_r: int, n_pad: int, n_stages: int,
                      a_resident: bool, activation: str):
    if a_resident:
        x_sc, a_vmem, sem = scratch
    else:
        x_sc, sem = scratch
        a_vmem = None

    l = pl.program_id(0)                 # stage index (outer, sequential)
    r = pl.program_id(1)                 # row-tile index (inner)
    row0 = pl.multiple_of(r * tile_r, tile_r)
    # Ping-pong slots inside the flattened (2*N_pad, D) activation scratch.
    read_off = pl.multiple_of((l % 2) * n_pad, tile_r)
    write_off = pl.multiple_of(((l + 1) % 2) * n_pad, tile_r)
    is_last = l == n_stages - 1

    # One-time manual DMA of X0 (and A, when VMEM-resident) into scratch.
    @pl.when(jnp.logical_and(l == 0, r == 0))
    def _():
        cp_x = pltpu.make_async_copy(x0_ref, x_sc.at[pl.ds(0, n_pad), :], sem.at[0])
        cp_x.start()
        if a_resident:
            cp_a = pltpu.make_async_copy(a_ref, a_vmem, sem.at[1])
            cp_a.start()
            cp_a.wait()
        cp_x.wait()

    # GCNConv stages:  X_next[tile] = act((A_tile @ X_prev) @ W_l + b_l)
    @pl.when(jnp.logical_not(is_last))
    def _():
        if a_resident:
            a_tile = a_vmem[pl.ds(row0, tile_r), :]     # A fully resident in VMEM
        else:
            a_tile = a_ref[...]                         # streamed (tile_r, N_pad) slab
        x_prev = x_sc[pl.ds(read_off, n_pad), :]
        agg = jnp.dot(a_tile, x_prev, preferred_element_type=jnp.float32)
        y = jnp.dot(agg.astype(jnp.bfloat16), w_ref[0],
                    preferred_element_type=jnp.float32) + b_ref[0]
        if activation == "relu":
            y = jnp.maximum(y, 0.0)
        else:                                           # leakyrelu(0.8), per the module
            y = jnp.where(y > 0.0, y, 0.8 * y)
        wstart = pl.multiple_of(write_off + row0, tile_r)
        # NOTE: padded rows (>= N) receive act(b); harmless because A's padded columns
        # are zero and the final result is sliced to [:N, :n_classes].
        x_sc[pl.ds(wstart, tile_r), :] = y.astype(x_sc.dtype)

    # Final Linear stage:  Y[tile] = X_prev[tile] @ W_L + b_L  (only writer of o_ref).
    @pl.when(is_last)
    def _():
        rstart = pl.multiple_of(read_off + row0, tile_r)
        x_tile = x_sc[pl.ds(rstart, tile_r), :]
        y = jnp.dot(x_tile, w_ref[0], preferred_element_type=jnp.float32) + b_ref[0]
        o_ref[...] = y.astype(o_ref.dtype)


# ---------------------------------------------------------------------------
# Wrapper: pad to lane-dense 128 widths, cast to bf16, build specs, call kernel
# ---------------------------------------------------------------------------
def gcn_forward(params, X, A, *, activation: str = "relu"):
    """params: list of (W, b); first n_layers entries are GCNConv, last is the Linear."""
    n_stages = len(params)
    n_gcn = n_stages - 1
    N, in_dim = X.shape
    n_classes = params[-1][0].shape[1]

    vmem_cap, kind = _device_vmem_and_kind()
    vmem_limit = max(32 * 1024 * 1024,
                     min(100 * 1024 * 1024, vmem_cap - 12 * 1024 * 1024))

    dims = [in_dim] + [w.shape[1] for (w, _) in params]
    D = _round_up(max(dims), 128)                 # shared lane-dense feature width
    TILE_R = 128 if "v5" in kind else 256         # 256-row tiles feed the 256x256 MXU
    TILE_R = min(TILE_R, _round_up(N, 128))
    N_pad = _round_up(N, TILE_R)
    R = N_pad // TILE_R

    # --- pad + cast inputs / stacked parameters (zero padding keeps math exact) ---
    A_pad = jnp.zeros((N_pad, N_pad), jnp.bfloat16).at[:N, :N].set(A.astype(jnp.bfloat16))
    X_pad = jnp.zeros((N_pad, D), jnp.bfloat16).at[:N, :in_dim].set(X.astype(jnp.bfloat16))
    W_all = jnp.zeros((n_stages, D, D), jnp.bfloat16)
    b_all = jnp.zeros((n_stages, 1, D), jnp.float32)
    for i, (W, b) in enumerate(params):
        W_all = W_all.at[i, : W.shape[0], : W.shape[1]].set(W.astype(jnp.bfloat16))
        b_all = b_all.at[i, 0, : b.shape[-1]].set(b.reshape(-1).astype(jnp.float32))

    # A-residency decision: single-buffered A scratch against the generation VMEM budget.
    x_sc_bytes = 2 * N_pad * D * 2
    fixed_bytes = (x_sc_bytes + 2 * D * D * 2 + 2 * TILE_R * D * 4
                   + 4 * 1024 * 1024)             # W / output pipeline buffers + margin
    a_resident = (N_pad * N_pad * 2) <= (vmem_limit - fixed_bytes)

    last = n_stages - 1
    if a_resident:
        a_spec = pl.BlockSpec(memory_space=pl.ANY)   # DMA'd once into VMEM scratch
        a_bytes = N_pad * N_pad * 2
    else:
        # Stream (TILE_R, N_pad) slabs; pin the slab index during the final Linear
        # stage so A is not re-fetched while it is never read.
        a_spec = pl.BlockSpec(
            (TILE_R, N_pad), lambda l, r: (jnp.where(l == last, R - 1, r), 0))
        a_bytes = N_pad * N_pad * 2 * max(n_gcn, 1)

    scratch_shapes = [pltpu.VMEM((2 * N_pad, D), jnp.bfloat16)]   # ping-pong activations
    if a_resident:
        scratch_shapes.append(pltpu.VMEM((N_pad, N_pad), jnp.bfloat16))
    scratch_shapes.append(pltpu.SemaphoreType.DMA((2,)))

    flops = 2 * N_pad * N_pad * D * n_gcn + 2 * N_pad * D * D * n_stages
    bytes_accessed = (a_bytes + N_pad * D * 2 + W_all.size * 2 + b_all.size * 4
                      + N_pad * D * 4)

    kernel = functools.partial(
        _fused_gcn_kernel, tile_r=TILE_R, n_pad=N_pad, n_stages=n_stages,
        a_resident=a_resident, activation=activation)

    out = pl.pallas_call(
        kernel,
        out_shape=jax.ShapeDtypeStruct((N_pad, D), jnp.float32),
        grid_spec=pltpu.PrefetchScalarGridSpec(
            num_scalar_prefetch=0,
            grid=(n_stages, R),
            in_specs=[
                a_spec,                                             # A (bf16)
                pl.BlockSpec(memory_space=pl.ANY),                  # X0 (bf16), DMA'd once
                pl.BlockSpec((1, D, D), lambda l, r: (l, 0, 0)),    # stacked weights
                pl.BlockSpec((1, 1, D), lambda l, r: (l, 0, 0)),    # stacked biases (f32)
            ],
            # Only the final stage writes the output; pin the block index to 0 during
            # the GCNConv stages so nothing is flushed to HBM before the final stage.
            out_specs=pl.BlockSpec(
                (TILE_R, D), lambda l, r: (jnp.where(l == last, r, 0), 0)),
            scratch_shapes=scratch_shapes,
        ),
        compiler_params=pltpu.CompilerParams(
            dimension_semantics=("arbitrary", "arbitrary"),   # scratch shared across r & l
            vmem_limit_bytes=int(vmem_limit),
        ),
        cost_estimate=pl.CostEstimate(
            flops=int(flops), transcendentals=0, bytes_accessed=int(bytes_accessed)),
    )(A_pad, X_pad, W_all, b_all)

    return out[:N, :n_classes]


# ---------------------------------------------------------------------------
# Parameter construction (kaiming-uniform-ish weights, small random biases)
# ---------------------------------------------------------------------------
def init_gcn_params(key, input_dim, hid_dim, n_classes, n_layers):
    params = []
    in_dims = [input_dim] + [hid_dim] * max(n_layers - 1, 0)
    for i in range(n_layers):
        key, kw, kb = jax.random.split(key, 3)
        fan_in = in_dims[i]
        bound = (6.0 / fan_in) ** 0.5
        W = jax.random.uniform(kw, (fan_in, hid_dim), jnp.float32, -bound, bound)
        b = jax.random.uniform(kb, (hid_dim,), jnp.float32, -0.1, 0.1)
        params.append((W, b))
    fan_in = hid_dim if n_layers != 0 else input_dim
    key, kw, kb = jax.random.split(key, 3)
    bound = (6.0 / fan_in) ** 0.5
    W = jax.random.uniform(kw, (fan_in, n_classes), jnp.float32, -bound, bound)
    b = jax.random.uniform(kb, (n_classes,), jnp.float32, -0.1, 0.1)
    params.append((W, b))
    return params


# ---------------------------------------------------------------------------
# Pure-JAX reference (same bf16-input / f32-accumulate numerics, same (A@X)@W order)
# ---------------------------------------------------------------------------
def gcn_forward_ref(params, X, A, *, activation: str = "relu"):
    def act(y):
        if activation == "relu":
            return jnp.maximum(y, 0.0)
        return jnp.where(y > 0, y, 0.8 * y)

    Ab = A.astype(jnp.bfloat16)
    x = X.astype(jnp.bfloat16)
    y = None
    for i, (W, b) in enumerate(params):
        Wb = W.astype(jnp.bfloat16)
        if i < len(params) - 1:
            agg = jnp.dot(Ab, x, preferred_element_type=jnp.float32)
            y = act(jnp.dot(agg.astype(jnp.bfloat16), Wb,
                            preferred_element_type=jnp.float32) + b)
        else:
            y = jnp.dot(x, Wb, preferred_element_type=jnp.float32) + b
        x = y.astype(jnp.bfloat16)
    return y


if __name__ == "__main__":
    # Small shapes consistent with the module.
    N = 64            # number of graph nodes
    input_dim = 16
    hid_dim = 32
    n_classes = 4
    n_layers = 2

    key = jax.random.PRNGKey(0)
    kx, ka, kp = jax.random.split(key, 3)

    X = jax.random.normal(kx, (N, input_dim), jnp.float32)

    # Deterministic symmetric adjacency with self-loops, row-normalized.
    A_raw = (jax.random.uniform(ka, (N, N)) > 0.8).astype(jnp.float32)
    A_raw = jnp.maximum(A_raw, A_raw.T) + jnp.eye(N, dtype=jnp.float32)
    A = A_raw / jnp.sum(A_raw, axis=1, keepdims=True)

    params = init_gcn_params(kp, input_dim, hid_dim, n_classes, n_layers)

    for act_name in ("relu", "leakyrelu"):
        out = gcn_forward(params, X, A, activation=act_name)
        out = jax.block_until_ready(out)
        ref = gcn_forward_ref(params, X, A, activation=act_name)
        assert out.shape == (N, n_classes)
        err = float(jnp.max(jnp.abs(out - ref)))
        assert jnp.allclose(out, ref, atol=2e-2, rtol=2e-2), (act_name, err)

    print("KERNEL_OK")
</pallas_src>

<mosaic_0001>
module attributes {stable_mosaic.version = 11 : i64} {
  func.func @_fused_gcn_kernel(%arg0: i32, %arg1: i32, %arg2: memref<128x128xbf16, #tpu.memory_space<any>>, %arg3: memref<128x128xbf16, #tpu.memory_space<any>>, %arg4: memref<1x128x128xbf16, #tpu.memory_space<vmem>>, %arg5: memref<1x1x128xf32, #tpu.memory_space<vmem>>, %arg6: memref<128x128xf32, #tpu.memory_space<vmem>>, %arg7: memref<256x128xbf16, #tpu.memory_space<vmem>>, %arg8: memref<128x128xbf16, #tpu.memory_space<vmem>>, %arg9: memref<2x!tpu.dma_semaphore, #tpu.memory_space<semaphore_mem>>) attributes {dimension_semantics = [#tpu.dimension_semantics<arbitrary>, #tpu.dimension_semantics<arbitrary>], iteration_bounds = array<i64: 3, 1>, scalar_prefetch = 0 : i64, scratch_operands = 3 : i64, tpu.core_type = #tpu.core_type<tc>, window_params = [{}, {}, {transform_indices = @transform_2, window_bounds = array<i64: 1, 128, 128>}, {transform_indices = @transform_3, window_bounds = array<i64: 1, 1, 128>}, {transform_indices = @transform_4, window_bounds = array<i64: 128, 128>}]} {
    %c128_i32 = arith.constant 128 : i32
    %0 = arith.muli %arg1, %c128_i32 : i32
    %1 = tpu.assume_multiple %0, 128 : i32
    %c2_i32 = arith.constant 2 : i32
    %c0_i32 = arith.constant 0 : i32
    %2 = arith.cmpi eq, %c2_i32, %c0_i32 : i32
    %c1_i32 = arith.constant 1 : i32
    %3 = arith.select %2, %c1_i32, %c2_i32 : i32
    %4 = arith.remsi %arg0, %3 : i32
    %c0_i32_0 = arith.constant 0 : i32
    %5 = arith.cmpi ne, %4, %c0_i32_0 : i32
    %c0_i32_1 = arith.constant 0 : i32
    %6 = arith.cmpi slt, %4, %c0_i32_1 : i32
    %c0_i32_2 = arith.constant 0 : i32
    %7 = arith.cmpi slt, %3, %c0_i32_2 : i32
    %8 = arith.xori %6, %7 : i1
    %9 = arith.andi %8, %5 : i1
    %10 = arith.addi %4, %3 : i32
    %11 = arith.select %9, %10, %4 : i32
    %c128_i32_3 = arith.constant 128 : i32
    %12 = arith.muli %11, %c128_i32_3 : i32
    %13 = tpu.assume_multiple %12, 128 : i32
    %c1_i32_4 = arith.constant 1 : i32
    %14 = arith.addi %arg0, %c1_i32_4 : i32
    %c2_i32_5 = arith.constant 2 : i32
    %c0_i32_6 = arith.constant 0 : i32
    %15 = arith.cmpi eq, %c2_i32_5, %c0_i32_6 : i32
    %c1_i32_7 = arith.constant 1 : i32
    %16 = arith.select %15, %c1_i32_7, %c2_i32_5 : i32
    %17 = arith.remsi %14, %16 : i32
    %c0_i32_8 = arith.constant 0 : i32
    %18 = arith.cmpi ne, %17, %c0_i32_8 : i32
    %c0_i32_9 = arith.constant 0 : i32
    %19 = arith.cmpi slt, %17, %c0_i32_9 : i32
    %c0_i32_10 = arith.constant 0 : i32
    %20 = arith.cmpi slt, %16, %c0_i32_10 : i32
    %21 = arith.xori %19, %20 : i1
    %22 = arith.andi %21, %18 : i1
    %23 = arith.addi %17, %16 : i32
    %24 = arith.select %22, %23, %17 : i32
    %c128_i32_11 = arith.constant 128 : i32
    %25 = arith.muli %24, %c128_i32_11 : i32
    %26 = tpu.assume_multiple %25, 128 : i32
    %c2_i32_12 = arith.constant 2 : i32
    %27 = arith.cmpi eq, %arg0, %c2_i32_12 : i32
    %c0_i32_13 = arith.constant 0 : i32
    %28 = arith.cmpi eq, %arg0, %c0_i32_13 : i32
    %c0_i32_14 = arith.constant 0 : i32
    %29 = arith.cmpi eq, %arg1, %c0_i32_14 : i32
    %30 = arith.andi %28, %29 : i1
    %31 = arith.extui %30 : i1 to i32
    %c0_i32_15 = arith.constant 0 : i32
    %32 = arith.cmpi ne, %31, %c0_i32_15 : i32
    scf.if %32 {
      %c0_i32_18 = arith.constant 0 : i32
      %c0_i32_19 = arith.constant 0 : i32
      %c0_i32_20 = arith.constant 0 : i32
      %38 = tpu.memref_slice %arg7[%c0_i32_19, %c0_i32_20] : memref<256x128xbf16, #tpu.memory_space<vmem>> -> memref<128x128xbf16, #tpu.memory_space<vmem>>
      %39 = tpu.memref_slice %arg9[%c0_i32_18] : memref<2x!tpu.dma_semaphore, #tpu.memory_space<semaphore_mem>> -> memref<1x!tpu.dma_semaphore, #tpu.memory_space<semaphore_mem>>
      %40 = tpu.memref_squeeze %39 : memref<1x!tpu.dma_semaphore, #tpu.memory_space<semaphore_mem>> -> memref<!tpu.dma_semaphore, #tpu.memory_space<semaphore_mem>>
      tpu.enqueue_dma source(%arg3 : memref<128x128xbf16, #tpu.memory_space<any>>) target(%38 : memref<128x128xbf16, #tpu.memory_space<vmem>>) target_semaphore(%40 : memref<!tpu.dma_semaphore, #tpu.memory_space<semaphore_mem>>)
      %c1_i32_21 = arith.constant 1 : i32
      %41 = tpu.memref_slice %arg9[%c1_i32_21] : memref<2x!tpu.dma_semaphore, #tpu.memory_space<semaphore_mem>> -> memref<1x!tpu.dma_semaphore, #tpu.memory_space<semaphore_mem>>
      %42 = tpu.memref_squeeze %41 : memref<1x!tpu.dma_semaphore, #tpu.memory_space<semaphore_mem>> -> memref<!tpu.dma_semaphore, #tpu.memory_space<semaphore_mem>>
      tpu.enqueue_dma source(%arg2 : memref<128x128xbf16, #tpu.memory_space<any>>) target(%arg8 : memref<128x128xbf16, #tpu.memory_space<vmem>>) target_semaphore(%42 : memref<!tpu.dma_semaphore, #tpu.memory_space<semaphore_mem>>)
      %c1_i32_22 = arith.constant 1 : i32
      %43 = tpu.memref_slice %arg9[%c1_i32_22] : memref<2x!tpu.dma_semaphore, #tpu.memory_space<semaphore_mem>> -> memref<1x!tpu.dma_semaphore, #tpu.memory_space<semaphore_mem>>
      %44 = tpu.memref_squeeze %43 : memref<1x!tpu.dma_semaphore, #tpu.memory_space<semaphore_mem>> -> memref<!tpu.dma_semaphore, #tpu.memory_space<semaphore_mem>>
      tpu.wait_dma2 semaphore(%44 : memref<!tpu.dma_semaphore, #tpu.memory_space<semaphore_mem>>) src(%arg2 : memref<128x128xbf16, #tpu.memory_space<any>>) dst(%arg8 : memref<128x128xbf16, #tpu.memory_space<vmem>>)
      %c0_i32_23 = arith.constant 0 : i32
      %c0_i32_24 = arith.constant 0 : i32
      %c0_i32_25 = arith.constant 0 : i32
      %45 = tpu.memref_slice %arg7[%c0_i32_24, %c0_i32_25] : memref<256x128xbf16, #tpu.memory_space<vmem>> -> memref<128x128xbf16, #tpu.memory_space<vmem>>
      %46 = tpu.memref_slice %arg9[%c0_i32_23] : memref<2x!tpu.dma_semaphore, #tpu.memory_space<semaphore_mem>> -> memref<1x!tpu.dma_semaphore, #tpu.memory_space<semaphore_mem>>
      %47 = tpu.memref_squeeze %46 : memref<1x!tpu.dma_semaphore, #tpu.memory_space<semaphore_mem>> -> memref<!tpu.dma_semaphore, #tpu.memory_space<semaphore_mem>>
      tpu.wait_dma2 semaphore(%47 : memref<!tpu.dma_semaphore, #tpu.memory_space<semaphore_mem>>) src(%arg3 : memref<128x128xbf16, #tpu.memory_space<any>>) dst(%45 : memref<128x128xbf16, #tpu.memory_space<vmem>>)
    } else {
    }
    %true = arith.constant true
    %33 = arith.xori %27, %true : i1
    %34 = arith.extui %33 : i1 to i32
    %c0_i32_16 = arith.constant 0 : i32
    %35 = arith.cmpi ne, %34, %c0_i32_16 : i32
    scf.if %35 {
      %38 = arith.index_cast %1 : i32 to index
      %c0 = arith.constant 0 : index
      %39 = vector.load %arg8[%38, %c0] : memref<128x128xbf16, #tpu.memory_space<vmem>>, vector<128x128xbf16>
      %40 = arith.index_cast %13 : i32 to index
      %c0_18 = arith.constant 0 : index
      %41 = vector.load %arg7[%40, %c0_18] : memref<256x128xbf16, #tpu.memory_space<vmem>>, vector<128x128xbf16>
      %cst = arith.constant dense<0.000000e+00> : vector<128x128xf32>
      %42 = tpu.matmul %39, %41, %cst {dimension_numbers = #tpu.dot_dimension_numbers<[1], [0], [0], [1], [0, 0, 1, 1], [], []>} : vector<128x128xbf16>, vector<128x128xbf16>, vector<128x128xf32> -> vector<128x128xf32>
      %43 = arith.truncf %42 : vector<128x128xf32> to vector<128x128xbf16>
      %c0_19 = arith.constant 0 : index
      %c0_20 = arith.constant 0 : index
      %c0_21 = arith.constant 0 : index
      %44 = vector.load %arg4[%c0_19, %c0_20, %c0_21] : memref<1x128x128xbf16, #tpu.memory_space<vmem>>, vector<1x128x128xbf16>
      %45 = vector.shape_cast %44 : vector<1x128x128xbf16> to vector<128x128xbf16>
      %cst_22 = arith.constant dense<0.000000e+00> : vector<128x128xf32>
      %46 = tpu.matmul %43, %45, %cst_22 {dimension_numbers = #tpu.dot_dimension_numbers<[1], [0], [0], [1], [0, 0, 1, 1], [], []>} : vector<128x128xbf16>, vector<128x128xbf16>, vector<128x128xf32> -> vector<128x128xf32>
      %c0_23 = arith.constant 0 : index
      %c0_24 = arith.constant 0 : index
      %c0_25 = arith.constant 0 : index
      %47 = vector.load %arg5[%c0_23, %c0_24, %c0_25] : memref<1x1x128xf32, #tpu.memory_space<vmem>>, vector<1x1x128xf32>
      %48 = vector.shape_cast %47 : vector<1x1x128xf32> to vector<1x128xf32>
      %49 = vector.broadcast %48 : vector<1x128xf32> to vector<128x128xf32>
      %50 = arith.addf %46, %49 : vector<128x128xf32>
      %cst_26 = arith.constant 0.000000e+00 : f32
      %51 = vector.broadcast %cst_26 : f32 to vector<128x128xf32>
      %52 = arith.maximumf %50, %51 : vector<128x128xf32>
      %53 = arith.addi %26, %1 : i32
      %54 = tpu.assume_multiple %53, 128 : i32
      %55 = arith.truncf %52 : vector<128x128xf32> to vector<128x128xbf16>
      %56 = arith.index_cast %54 : i32 to index
      %c0_27 = arith.constant 0 : index
      %57 = vector.load %arg7[%56, %c0_27] : memref<256x128xbf16, #tpu.memory_space<vmem>>, vector<128x128xbf16>
      tpu.vector_store %arg7[%56, %c0_27], %55 {strides = array<i32>} : memref<256x128xbf16, #tpu.memory_space<vmem>>, vector<128x128xbf16>,
    } else {
    }
    %36 = arith.extui %27 : i1 to i32
    %c0_i32_17 = arith.constant 0 : i32
    %37 = arith.cmpi ne, %36, %c0_i32_17 : i32
    scf.if %37 {
      %38 = arith.addi %13, %1 : i32
      %39 = tpu.assume_multiple %38, 128 : i32
      %40 = arith.index_cast %39 : i32 to index
      %c0 = arith.constant 0 : index
      %41 = vector.load %arg7[%40, %c0] : memref<256x128xbf16, #tpu.memory_space<vmem>>, vector<128x128xbf16>
      %c0_18 = arith.constant 0 : index
      %c0_19 = arith.constant 0 : index
      %c0_20 = arith.constant 0 : index
      %42 = vector.load %arg4[%c0_18, %c0_19, %c0_20] : memref<1x128x128xbf16, #tpu.memory_space<vmem>>, vector<1x128x128xbf16>
      %43 = vector.shape_cast %42 : vector<1x128x128xbf16> to vector<128x128xbf16>
      %cst = arith.constant dense<0.000000e+00> : vector<128x128xf32>
      %44 = tpu.matmul %41, %43, %cst {dimension_numbers = #tpu.dot_dimension_numbers<[1], [0], [0], [1], [0, 0, 1, 1], [], []>} : vector<128x128xbf16>, vector<128x128xbf16>, vector<128x128xf32> -> vector<128x128xf32>
      %c0_21 = arith.constant 0 : index
      %c0_22 = arith.constant 0 : index
      %c0_23 = arith.constant 0 : index
      %45 = vector.load %arg5[%c0_21, %c0_22, %c0_23] : memref<1x1x128xf32, #tpu.memory_space<vmem>>, vector<1x1x128xf32>
      %46 = vector.shape_cast %45 : vector<1x1x128xf32> to vector<1x128xf32>
      %47 = vector.broadcast %46 : vector<1x128xf32> to vector<128x128xf32>
      %48 = arith.addf %44, %47 : vector<128x128xf32>
      %c0_24 = arith.constant 0 : index
      %c0_25 = arith.constant 0 : index
      %49 = vector.load %arg6[%c0_24, %c0_25] : memref<128x128xf32, #tpu.memory_space<vmem>>, vector<128x128xf32>
      tpu.vector_store %arg6[%c0_24, %c0_25], %48 {strides = array<i32>} : memref<128x128xf32, #tpu.memory_space<vmem>>, vector<128x128xf32>,
    } else {
    }
    return
  }
  func.func @transform_2(%arg0: i32, %arg1: i32) -> (i32, i32, i32) {
    %c0_i32 = arith.constant 0 : i32
    %c0_i32_0 = arith.constant 0 : i32
    %c0_i32_1 = arith.constant 0 : i32
    return %arg0, %c0_i32, %c0_i32_0 : i32, i32, i32
  }
  func.func @transform_3(%arg0: i32, %arg1: i32) -> (i32, i32, i32) {
    %c0_i32 = arith.constant 0 : i32
    %c0_i32_0 = arith.constant 0 : i32
    %c0_i32_1 = arith.constant 0 : i32
    return %arg0, %c0_i32, %c0_i32_0 : i32, i32, i32
  }
  func.func @transform_4(%arg0: i32, %arg1: i32) -> (i32, i32) {
    %c2_i32 = arith.constant 2 : i32
    %0 = arith.cmpi eq, %arg0, %c2_i32 : i32
    %c0_i32 = arith.constant 0 : i32
    %1 = arith.select %0, %arg1, %c0_i32 : i32
    %c0_i32_0 = arith.constant 0 : i32
    %c0_i32_1 = arith.constant 0 : i32
    return %1, %c0_i32_0 : i32, i32
  }
}

</mosaic_0001>

<llo_original>
// kernel: tpu_custom_call.1
$region0: #{tpu_custom_call.1}
  #allocation0 [shape = 'u32[]', space=smem, size = 0x4, offset = 0x4, fixed_abs, tag = 'smem constant byte address 0x4 - core index']
  #allocation1 [shape = 'u32[144,128]{1,0:T(1,128)}', space=vmem, size = 0x12000, scoped, tag = 'internal scratch']
  #allocation2 [shape = 'bf16[256,128]{1,0:T(8,128)(2,1)}', space=vmem, size = 0x10000, scoped, tag = 'scratch operand']
  #allocation3 [shape = 'bf16[128,128]{1,0:T(8,128)(2,1)}', space=vmem, size = 0x8000, scoped, tag = 'scratch operand']
  #allocation4 [shape = 's32[2]{0}', space=sflag, size = 0x8, scoped, tag = 'scratch operand']
  #allocation9 [shape = 's32[]', space=sflag, size = 0x4, offset = 0, fixed_abs, tag = 'sflag constant byte address 0x0 - dummy sync flag']
  #allocation10 [shape = 's32[]', space=sflag, size = 0x4, offset = 0, fixed_abs, tag = 'sflag constant byte address 0x0 - dummy sync flag']
  #allocation11 [shape = 'u32[]', space=smem, size = 0x4, offset = 0x44, fixed_abs, tag = 'smem constant byte address 0x44 - assertion arg 0']
  #allocation12 [shape = 'u32[]', space=smem, size = 0x4, offset = 0x48, fixed_abs, tag = 'smem constant byte address 0x48 - assertion arg 1']
  #allocation13 [shape = 's32[]', space=sflag, size = 0x4, offset = 0, fixed_abs, tag = 'sflag constant byte address 0x0 - dummy sync flag']
  #allocation14 [shape = 's32[]', space=sflag, size = 0x4, offset = 0, fixed_abs, tag = 'sflag constant byte address 0x0 - dummy sync flag']
  %s0 = inlined_call_operand.hbm [shape: bf16[128,128], index: 0, kind: input, shape index: {}]
  %s1 = inlined_call_operand.hbm [shape: bf16[128,128], index: 1, kind: input, shape index: {}]
  %s2 = inlined_call_operand.hbm [shape: bf16[3,128,128], index: 2, kind: input, shape index: {}]
  %s3 = inlined_call_operand.vmem [shape: f32[3,1,128], index: 3, kind: input, shape index: {}]
  %s4 = inlined_call_operand.hbm [shape: f32[128,128], index: 4, kind: output, shape index: {}]
  %s5 = sld [smem:[#allocation0]]
  $region65: #{tpu_custom_call.1} parent=0
    _
  %s7 = ssub.s32 1, %s5
  %s8 = scalar_select 0, %s7, %s5
  $region1: #{tpu_custom_call.1} parent=0
    #allocation5 [shape = 'u8[65536]{0}', space=vmem, size = 0x10000, scoped, tag = 'input window, operand 2']
    #allocation6 [shape = 's32[2]{0}', space=sflag, size = 0x8, scoped, tag = 'scoped memory for tpu_custom_call.1']
    #allocation7 [shape = 's32[2]{0}', space=sflag, size = 0x8, scoped, tag = 'scoped memory for tpu_custom_call.1']
    #allocation8 [shape = 'u8[131072]{0}', space=vmem, size = 0x20000, scoped, tag = 'output window, operand 0']
    %9 = vsyncpa [#allocation6], 0
    %s10 = scalar_lea.sflag [#allocation6], 1
    %11 = vsyncpa %s10, 0
    %12 = vsyncpa [#allocation7], 0
    %s13 = scalar_lea.sflag [#allocation7], 1
    %14 = vsyncpa %s13, 0
    loop: start=0, step=1, limit=5
    $region2: #{tpu_custom_call.1} parent=1 // loop_pre_header
      _
    $region3: #{tpu_custom_call.1} parent=1 // loop_header
      %s16 = sphi 0, %s20
      %p17 = scmp.ge.s32.totalorder %s16, 5
      %s23 = sphi 0, %s35
      %s24 = sphi 0, %s31
      %s25 = sphi 0, %s23
      %s26 = sphi 0, %s24
      %s27 = sphi 0, %s25
      %s28 = sphi 0, %s26
      %s38 = sphi 0, %s40
      %s41 = sphi 0, %s38
      %s42 = sphi 0, %s41
      %s58 = sphi 0, %s42
      %s64 = sphi 0, %s66
      %s67 = sphi 0, %s64
      %s68 = sphi 0, %s67
      %s84 = sphi 0, %s68
      %s94 = sphi 0, %s96
      %s97 = sphi 0, %s94
      %s98 = sphi 0, %s97
      %s114 = sphi 0, %s98
    $region4: #{tpu_custom_call.1} parent=1 // loop_header_branch
      %19 = sbr.rel (%p17) target = $region8
    $region5: #{tpu_custom_call.1} parent=1 // loop_body
      %s21 = ssub.s32 %s16, 1
      %s22 = ssub.s32 %s16, 2
      %s29 = sadd.s32 1, %s24
      %p30 = scmp.ge.s32.totalorder %s29, 1
      %s31 = scalar_select %p30, 0, %s29
      %s32 = sadd.s32 1, %s23
      %s33 = scalar_select %p30, %s32, %s23
      %p34 = scmp.ge.s32.totalorder %s33, 3
      %s35 = scalar_select %p34, 0, %s33
      %s36 = ssub.s32 %s23, %s35
      %p37 = scmp.eq.s32.totalorder %s36, 0
      %s39 = sadd.s32 %s38, 1
      %s40 = scalar_select %p37, %s38, %s39
      %p43 = pneg %p37
      %p44 = scmp.eq.s32.totalorder %s16, 2
      %p45 = por %p43, %p44
      %p46 = scmp.ne.s32.totalorder %s38, %s41
      %p47 = scmp.eq.s32.totalorder %s16, 0
      %p48 = por %p46, %p47
      %p49 = scmp.ne.s32.totalorder %s38, %s41
      %p50 = scmp.eq.s32.totalorder %s21, 2
      %p51 = por %p49, %p50
      %p52 = scmp.ne.s32.totalorder %s41, %s42
      %p53 = scmp.eq.s32.totalorder %s21, 0
      %p54 = por %p52, %p53
      %p55 = scmp.ne.s32.totalorder %s41, %s42
      %p56 = scmp.eq.s32.totalorder %s22, 2
      %p57 = por %p55, %p56
      %p59 = scmp.ne.s32.totalorder %s42, %s58
      %p60 = scmp.eq.s32.totalorder %s22, 0
      %p61 = por %p59, %p60
      %s62 = ssub.s32 %s23, %s35
      %p63 = scmp.eq.s32.totalorder %s62, 0
      %s65 = sadd.s32 %s64, 1
      %s66 = scalar_select %p63, %s64, %s65
      %p69 = pneg %p63
      %p70 = scmp.eq.s32.totalorder %s16, 2
      %p71 = por %p69, %p70
      %p72 = scmp.ne.s32.totalorder %s64, %s67
      %p73 = scmp.eq.s32.totalorder %s16, 0
      %p74 = por %p72, %p73
      %p75 = scmp.ne.s32.totalorder %s64, %s67
      %p76 = scmp.eq.s32.totalorder %s21, 2
      %p77 = por %p75, %p76
      %p78 = scmp.ne.s32.totalorder %s67, %s68
      %p79 = scmp.eq.s32.totalorder %s21, 0
      %p80 = por %p78, %p79
      %p81 = scmp.ne.s32.totalorder %s67, %s68
      %p82 = scmp.eq.s32.totalorder %s22, 2
      %p83 = por %p81, %p82
      %p85 = scmp.ne.s32.totalorder %s68, %s84
      %p86 = scmp.eq.s32.totalorder %s22, 0
      %p87 = por %p85, %p86
      %p88 = scmp.eq.s32.totalorder %s23, 2
      %s89 = scalar_select %p88, %s24, 0
      %p90 = scmp.eq.s32.totalorder %s35, 2
      %s91 = scalar_select %p90, %s31, 0
      %s92 = ssub.s32 %s89, %s91
      %p93 = scmp.eq.s32.totalorder %s92, 0
      %s95 = sadd.s32 %s94, 1
      %s96 = scalar_select %p93, %s94, %s95
      %p99 = pneg %p93
      %p100 = scmp.eq.s32.totalorder %s16, 2
      %p101 = por %p99, %p100
      %p102 = scmp.ne.s32.totalorder %s94, %s97
      %p103 = scmp.eq.s32.totalorder %s16, 0
      %p104 = por %p102, %p103
      %p105 = scmp.ne.s32.totalorder %s94, %s97
      %p106 = scmp.eq.s32.totalorder %s21, 2
      %p107 = por %p105, %p106
      %p108 = scmp.ne.s32.totalorder %s97, %s98
      %p109 = scmp.eq.s32.totalorder %s21, 0
      %p110 = por %p108, %p109
      %p111 = scmp.ne.s32.totalorder %s97, %s98
      %p112 = scmp.eq.s32.totalorder %s22, 2
      %p113 = por %p111, %p112
      %p115 = scmp.ne.s32.totalorder %s98, %s114
      %p116 = scmp.eq.s32.totalorder %s22, 0
      %p117 = por %p115, %p116
      %p118 = scmp.le.s32.totalorder 1, %s16
      %p119 = scmp.lt.s32.totalorder %s16, 4
      %p120 = pnand %p118, %p119
      %p121 = pneg %p120
      // Predicated region
      $region9: #{tpu_custom_call.1} parent=5 // pred_check
        _
      $region10: #{tpu_custom_call.1} parent=5 // pred_check_branch
        %123 = sbr.rel (%p120) target = $region12
      $region11: #{tpu_custom_call.1} parent=5 // pred_region
        %s124 = ssub.s32 %s16, 1
      $region12: #{tpu_custom_call.1} parent=5 // pred_fallthru
        _
      %p125 = scmp.lt.s32.totalorder %s16, 3
      // Predicated region
      $region13: #{tpu_custom_call.1} parent=5 // pred_check
        %p126 = pneg %p125
      $region14: #{tpu_custom_call.1} parent=5 // pred_check_branch
        %128 = sbr.rel (%p126) target = $region16
      $region15: #{tpu_custom_call.1} parent=5 // pred_region
        // Predicated region
        $region17: #{tpu_custom_call.1} parent=15 // pred_check
          %p129 = pneg %p48
        $region18: #{tpu_custom_call.1} parent=15 // pred_check_branch
          %131 = sbr.rel (%p129) target = $region20
        $region19: #{tpu_custom_call.1} parent=15 // pred_region
          %s132 = sand.u32 %s38, 1
          %s133 = scalar_lea.sflag [#allocation6], %s132
          %s134 = sand.u32 %s38, 1
          %s135 = smul.addr %s134, 64
          %s136 = scalar_lea.vmem [#allocation5], %s135
          %s138 = ssub.s32 1024, 1024
          %139 = vsyncadd %s133, %s138
          %s140 = smul.addr %s23, 16
          %s141 = smul.addr %s140, 64
          %s142 = scalar_lea.hbm %s2, %s141
          %s143 = sshll.u32 %s136, 4
          %s144 = int_to_ptr.vmem [resolvable:$true] %s143
          %149 = dma.hbm_to_vmem [thread:$0]  %s142, 1024, %s144, %s133, 64, 64, 4
        $region20: #{tpu_custom_call.1} parent=15 // pred_fallthru
          _
        // Predicated region
        $region21: #{tpu_custom_call.1} parent=15 // pred_check
          %p150 = pneg %p74
        $region22: #{tpu_custom_call.1} parent=15 // pred_check_branch
          %152 = sbr.rel (%p150) target = $region24
        $region23: #{tpu_custom_call.1} parent=15 // pred_region
          %p153 = scmp.lt.s32.totalorder %s23, 2
          %s154 = scalar_select %p153, %s23, 2
          %s155 = scalar_lea.vmem %s3, %s154
        $region24: #{tpu_custom_call.1} parent=15 // pred_fallthru
          _
      $region16: #{tpu_custom_call.1} parent=5 // pred_fallthru
        _
      %p156 = scmp.le.s32.totalorder 1, %s16
      %p157 = scmp.lt.s32.totalorder %s16, 4
      %p158 = pnand %p156, %p157
      %p159 = pneg %p158
      // Predicated region
      $region25: #{tpu_custom_call.1} parent=5 // pred_check
        _
      $region26: #{tpu_custom_call.1} parent=5 // pred_check_branch
        %161 = sbr.rel (%p158) target = $region28
      $region27: #{tpu_custom_call.1} parent=5 // pred_region
        %s162 = ssub.s32 %s16, 1
        %s163 = sand.u32 %s41, 1
        %s164 = scalar_lea.sflag [#allocation6], %s163
        %s165 = sand.u32 %s41, 1
        %s166 = smul.addr %s165, 64
        %s167 = scalar_lea.vmem [#allocation5], %s166
        // Predicated region
        $region29: #{tpu_custom_call.1} parent=27 // pred_check
          %p168 = pneg %p54
        $region30: #{tpu_custom_call.1} parent=27 // pred_check_branch
          %170 = sbr.rel (%p168) target = $region32
        $region31: #{tpu_custom_call.1} parent=27 // pred_region
          %171 = dma.done %s164, 1024
        $region32: #{tpu_custom_call.1} parent=27 // pred_fallthru
          _
        %s172 = sand.u32 %s41, 1
        %s173 = scalar_lea.sflag [#allocation6], %s172
        %s174 = sand.u32 %s41, 1
        %s175 = smul.addr %s174, 64
        %s176 = scalar_lea.vmem [#allocation5], %s175
        %p177 = pneg %p54
        %p178 = pneg %p51
        %p179 = scmp.lt.s32.totalorder %s25, 2
        %s180 = scalar_select %p179, %s25, 2
        %s181 = scalar_lea.vmem %s3, %s180
        %p182 = pneg %p80
        %p183 = pneg %p77
        %p184 = pneg %p110
        %p185 = pneg %p107
        %s186 = sand.u32 %s97, 1
        %s187 = scalar_lea.sflag [#allocation7], %s186
        %s188 = sand.u32 %s97, 1
        %s189 = smul.addr %s188, 128
        %s190 = scalar_lea.vmem [#allocation8], %s189
        %p191 = scmp.lt.s32.totalorder %s25, 2
        %s192 = scalar_select %p191, %s25, 2
        %s193 = scalar_lea.vmem %s3, %s192
        %p194 = scmp.eq.s32.totalorder %s25, 2
        %s195 = scalar_select %p194, %s26, 0
        %s196 = smul.u32 16, %s195
        %s198 = smul.u32 %s26, 128
        %p199 = scmp.lt.s32.totalorder %s25, 0
        %s200 = ssub.s32 0, %s25
        %s201 = scalar_select %p199, %s200, %s25
        %s202 = sand.u32 %s201, 1
        %s203 = ssub.s32 0, %s202
        %s204 = scalar_select %p199, %s203, %s202
        %p205 = scmp.ne.s32.totalorder %s204, 0
        %p206 = scmp.lt.s32.totalorder %s204, 0
        %p207 = pnand %p206, %p205
        %p208 = pneg %p207
        %s209 = sadd.s32 %s204, 2
        %s210 = scalar_select %p208, %s209, %s204
        %s211 = smul.u32 %s210, 128
        %s212 = sadd.s32 %s25, 1
        %p213 = scmp.lt.s32.totalorder %s212, 0
        %s214 = ssub.s32 0, %s212
        %s215 = scalar_select %p213, %s214, %s212
        %s216 = sand.u32 %s215, 1
        %s217 = ssub.s32 0, %s216
        %s218 = scalar_select %p213, %s217, %s216
        %p219 = scmp.ne.s32.totalorder %s218, 0
        %p220 = scmp.lt.s32.totalorder %s218, 0
        %p221 = pnand %p220, %p219
        %p222 = pneg %p221
        %s223 = sadd.s32 %s218, 2
        %s224 = scalar_select %p222, %s223, %s218
        %s225 = smul.u32 %s224, 128
        %p226 = scmp.eq.s32.totalorder %s25, 2
        %p227 = scmp.eq.s32.totalorder %s25, 0
        %p228 = scmp.eq.s32.totalorder %s26, 0
        %p229 = pnand %p227, %p228
        %p230 = pneg %p229
        // Predicated region
        $region33: #{tpu_custom_call.1} parent=27 // pred_check
          _
        $region34: #{tpu_custom_call.1} parent=27 // pred_check_branch
          %232 = sbr.rel (%p229) target = $region36
        $region35: #{tpu_custom_call.1} parent=27 // pred_region
          // Predicated region
          $region37: #{tpu_custom_call.1} parent=35 // pred_check
            _
          $region38: #{tpu_custom_call.1} parent=35 // pred_check_branch
            %234 = sbr.rel target = $region40
          $region39: #{tpu_custom_call.1} parent=35 // pred_region
            %235 = sst [smem:[#allocation11]] [#allocation10]
            %236 = sst [smem:[#allocation12]] [#allocation9]
          $region40: #{tpu_custom_call.1} parent=35 // pred_fallthru
            _
          %238 = shalt.err (0)
          %s240 = sshll.u32 [#allocation2], 4
          %s241 = int_to_ptr.vmem [resolvable:$true] %s240
          %243 = dma.hbm_to_vmem [thread:$0]  %s1, 1024, %s241, [#allocation4]
          %s244 = scalar_lea.sflag [#allocation4], 1
          // Predicated region
          $region41: #{tpu_custom_call.1} parent=35 // pred_check
            _
          $region42: #{tpu_custom_call.1} parent=35 // pred_check_branch
            %246 = sbr.rel target = $region44
          $region43: #{tpu_custom_call.1} parent=35 // pred_region
            %247 = sst [smem:[#allocation11]] [#allocation14]
            %248 = sst [smem:[#allocation12]] [#allocation13]
          $region44: #{tpu_custom_call.1} parent=35 // pred_fallthru
            _
          %250 = shalt.err (0)
          %s252 = sshll.u32 [#allocation3], 4
          %s253 = int_to_ptr.vmem [resolvable:$true] %s252
          %255 = dma.hbm_to_vmem [thread:$0]  %s0, 1024, %s253, %s244
          %s256 = smul.u32 4, 16
          %s257 = smul.u32 %s256, 1
          %s258 = sshll.u32 %s257, 4
          %259 = dma.done %s244, %s258
          %s260 = sshll.u32 %s257, 4
          %261 = dma.done [#allocation4], %s260
        $region36: #{tpu_custom_call.1} parent=27 // pred_fallthru
          _
        %p262 = scmp.ne.s32.totalorder %s25, 2
        // Predicated region
        $region45: #{tpu_custom_call.1} parent=27 // pred_check
          %p263 = pneg %p262
        $region46: #{tpu_custom_call.1} parent=27 // pred_check_branch
          %265 = sbr.rel (%p263) target = $region48
        $region47: #{tpu_custom_call.1} parent=27 // pred_region
          %s266 = sshra.s32 %s198, 3
          %s267 = sand.u32 %s198, 7
          %s268 = smul.addr %s266, 4
          %s269 = scalar_lea.vmem [#allocation3], %s268
          %v270 = vld [vmem:[%s269] sm:$0xf]
          %v271 = vld [vmem:[%s269 + $0x4] sm:$0xf]
          %v272 = vld [vmem:[%s269 + $0x8] sm:$0xf]
          %v273 = vld [vmem:[%s269 + $0xc] sm:$0xf]
          %v274 = vld [vmem:[%s269 + $0x10] sm:$0xf]
          %v275 = vld [vmem:[%s269 + $0x14] sm:$0xf]
          %v276 = vld [vmem:[%s269 + $0x18] sm:$0xf]
          %v277 = vld [vmem:[%s269 + $0x1c] sm:$0xf]
          %v278 = vld [vmem:[%s269 + $0x20] sm:$0xf]
          %v279 = vld [vmem:[%s269 + $0x24] sm:$0xf]
          %v280 = vld [vmem:[%s269 + $0x28] sm:$0xf]
          %v281 = vld [vmem:[%s269 + $0x2c] sm:$0xf]
          %v282 = vld [vmem:[%s269 + $0x30] sm:$0xf]
          %v283 = vld [vmem:[%s269 + $0x34] sm:$0xf]
          %v284 = vld [vmem:[%s269 + $0x38] sm:$0xf]
          %v285 = vld [vmem:[%s269 + $0x3c] sm:$0xf]
          %s286 = sshra.s32 %s211, 3
          %s287 = sand.u32 %s211, 7
          %s288 = smul.addr %s286, 4
          %s289 = scalar_lea.vmem [#allocation2], %s288
          %v290 = vld [vmem:[%s289] sm:$0xf]
          %v291 = vld [vmem:[%s289 + $0x4] sm:$0xf]
          %v292 = vld [vmem:[%s289 + $0x8] sm:$0xf]
          %v293 = vld [vmem:[%s289 + $0xc] sm:$0xf]
          %v294 = vld [vmem:[%s289 + $0x10] sm:$0xf]
          %v295 = vld [vmem:[%s289 + $0x14] sm:$0xf]
          %v296 = vld [vmem:[%s289 + $0x18] sm:$0xf]
          %v297 = vld [vmem:[%s289 + $0x1c] sm:$0xf]
          %v298 = vld [vmem:[%s289 + $0x20] sm:$0xf]
          %v299 = vld [vmem:[%s289 + $0x24] sm:$0xf]
          %v300 = vld [vmem:[%s289 + $0x28] sm:$0xf]
          %v301 = vld [vmem:[%s289 + $0x2c] sm:$0xf]
          %v302 = vld [vmem:[%s289 + $0x30] sm:$0xf]
          %v303 = vld [vmem:[%s289 + $0x34] sm:$0xf]
          %v304 = vld [vmem:[%s289 + $0x38] sm:$0xf]
          %v305 = vld [vmem:[%s289 + $0x3c] sm:$0xf]
          %v322 = vunpack.c.l.b16 %v270
          %v323 = vunpack.c.l.b16 %v271
          %v324 = vunpack.c.l.b16 %v272
          %v325 = vunpack.c.l.b16 %v273
          %v326 = vunpack.c.l.b16 %v274
          %v327 = vunpack.c.l.b16 %v275
          %v328 = vunpack.c.l.b16 %v276
          %v329 = vunpack.c.l.b16 %v277
          %v330 = vunpack.c.l.b16 %v278
          %v331 = vunpack.c.l.b16 %v279
          %v332 = vunpack.c.l.b16 %v280
          %v333 = vunpack.c.l.b16 %v281
          %v334 = vunpack.c.l.b16 %v282
          %v335 = vunpack.c.l.b16 %v283
          %v336 = vunpack.c.l.b16 %v284
          %v337 = vunpack.c.l.b16 %v285
          %v338 = vpack.c.b16 %v323, %v322
          %v339 = vpack.c.b16 %v325, %v324
          %v340 = vpack.c.b16 %v327, %v326
          %v341 = vpack.c.b16 %v329, %v328
          %v342 = vpack.c.b16 %v331, %v330
          %v343 = vpack.c.b16 %v333, %v332
          %v344 = vpack.c.b16 %v335, %v334
          %v345 = vpack.c.b16 %v337, %v336
          %v370 = vunpack.c.l.b16 %v290
          %v371 = vunpack.c.l.b16 %v291
          %v372 = vunpack.c.l.b16 %v292
          %v373 = vunpack.c.l.b16 %v293
          %v374 = vunpack.c.l.b16 %v294
          %v375 = vunpack.c.l.b16 %v295
          %v376 = vunpack.c.l.b16 %v296
          %v377 = vunpack.c.l.b16 %v297
          %v378 = vunpack.c.l.b16 %v298
          %v379 = vunpack.c.l.b16 %v299
          %v380 = vunpack.c.l.b16 %v300
          %v381 = vunpack.c.l.b16 %v301
          %v382 = vunpack.c.l.b16 %v302
          %v383 = vunpack.c.l.b16 %v303
          %v384 = vunpack.c.l.b16 %v304
          %v385 = vunpack.c.l.b16 %v305
          %v386 = vpack.c.b16 %v371, %v370
          %v387 = vpack.c.b16 %v373, %v372
          %v388 = vpack.c.b16 %v375, %v374
          %v389 = vpack.c.b16 %v377, %v376
          %v390 = vpack.c.b16 %v379, %v378
          %v391 = vpack.c.b16 %v381, %v380
          %v392 = vpack.c.b16 %v383, %v382
          %v393 = vpack.c.b16 %v385, %v384
          %402 = vmatprep.subr.bf16.mxu0 0
          %403 = vmatpush1.bf16.msra.mxu0 %v393
          %404 = vmatprep.subr.bf16.mxu0 0
          %405 = vmatpush1.bf16.msra.mxu0 %v392
          %406 = vmatprep.subr.bf16.mxu0 0
          %407 = vmatpush1.bf16.msra.mxu0 %v391
          %408 = vmatprep.subr.bf16.mxu0 0
          %409 = vmatpush1.bf16.msra.mxu0 %v390
          %410 = vmatprep.subr.bf16.mxu0 0
          %411 = vmatpush1.bf16.msra.mxu0 %v389
          %412 = vmatprep.subr.bf16.mxu0 0
          %413 = vmatpush1.bf16.msra.mxu0 %v388
          %414 = vmatprep.subr.bf16.mxu0 0
          %415 = vmatpush1.bf16.msra.mxu0 %v387
          %416 = vmatprep.subr.bf16.mxu0 0
          %417 = vmatpush1.bf16.msra.mxu0 %v386
          %418 = vmatprep.subr.bf16.mxu0 0
          %419 = vmatpush2.bf16.msra.mxu0 0
          %420 = vmatprep.subr.bf16.mxu0 0
          %421 = vmatpush2.bf16.msra.mxu0 0
          %422 = vmatprep.subr.bf16.mxu0 0
          %423 = vmatpush2.bf16.msra.mxu0 0
          %424 = vmatprep.subr.bf16.mxu0 0
          %425 = vmatpush2.bf16.msra.mxu0 0
          %426 = vmatprep.subr.bf16.mxu0 0
          %427 = vmatpush2.bf16.msra.mxu0 0
          %428 = vmatprep.subr.bf16.mxu0 0
          %429 = vmatpush2.bf16.msra.mxu0 0
          %430 = vmatprep.subr.bf16.mxu0 0
          %431 = vmatpush2.bf16.msra.mxu0 0
          %432 = vmatprep.subr.bf16.mxu0 0
          %433 = vmatpush2.bf16.msra.mxu0 0
          %434 = vmatprep.mubr.bf16.mxu0 0
          %435 = vmatmul.mubr.bf16.gmra.mxu0 %v338
          %v436 = vpop.f32.mrf.mxu0
          %v437 = vadd.f32 0.0, %v436
          %v438 = vpop.f32.mrf.mxu0
          %v439 = vpop.f32.mrf.mxu0
          %v440 = vadd.f32 0.0, %v439
          %v441 = vpop.f32.mrf.mxu0
          %442 = vmatprep.mubr.bf16.mxu0 0
          %443 = vmatmul.mubr.bf16.gmra.mxu0 %v339
          %v444 = vpop.f32.mrf.mxu0
          %v445 = vadd.f32 0.0, %v444
          %v446 = vpop.f32.mrf.mxu0
          %v447 = vpop.f32.mrf.mxu0
          %v448 = vadd.f32 0.0, %v447
          %v449 = vpop.f32.mrf.mxu0
          %450 = vmatprep.mubr.bf16.mxu0 0
          %451 = vmatmul.mubr.bf16.gmra.mxu0 %v340
          %v452 = vpop.f32.mrf.mxu0
          %v453 = vadd.f32 0.0, %v452
          %v454 = vpop.f32.mrf.mxu0
          %v455 = vpop.f32.mrf.mxu0
          %v456 = vadd.f32 0.0, %v455
          %v457 = vpop.f32.mrf.mxu0
          %458 = vmatprep.mubr.bf16.mxu0 0
          %459 = vmatmul.mubr.bf16.gmra.mxu0 %v341
          %v460 = vpop.f32.mrf.mxu0
          %v461 = vadd.f32 0.0, %v460
          %v462 = vpop.f32.mrf.mxu0
          %v463 = vpop.f32.mrf.mxu0
          %v464 = vadd.f32 0.0, %v463
          %v465 = vpop.f32.mrf.mxu0
          %466 = vmatprep.mubr.bf16.mxu0 0
          %467 = vmatmul.mubr.bf16.gmra.mxu0 %v342
          %v468 = vpop.f32.mrf.mxu0
          %v469 = vadd.f32 0.0, %v468
          %v470 = vpop.f32.mrf.mxu0
          %v471 = vpop.f32.mrf.mxu0
          %v472 = vadd.f32 0.0, %v471
          %v473 = vpop.f32.mrf.mxu0
          %474 = vmatprep.mubr.bf16.mxu0 0
          %475 = vmatmul.mubr.bf16.gmra.mxu0 %v343
          %v476 = vpop.f32.mrf.mxu0
          %v477 = vadd.f32 0.0, %v476
          %v478 = vpop.f32.mrf.mxu0
          %v479 = vpop.f32.mrf.mxu0
          %v480 = vadd.f32 0.0, %v479
          %v481 = vpop.f32.mrf.mxu0
          %482 = vmatprep.mubr.bf16.mxu0 0
          %483 = vmatmul.mubr.bf16.gmra.mxu0 %v344
          %v484 = vpop.f32.mrf.mxu0
          %v485 = vadd.f32 0.0, %v484
          %v486 = vpop.f32.mrf.mxu0
          %v487 = vpop.f32.mrf.mxu0
          %v488 = vadd.f32 0.0, %v487
          %v489 = vpop.f32.mrf.mxu0
          %490 = vmatprep.mubr.bf16.mxu0 0
          %491 = vmatmul.mubr.bf16.gmra.mxu0 %v345
          %v492 = vpop.f32.mrf.mxu0
          %v493 = vadd.f32 0.0, %v492
          %v494 = vpop.f32.mrf.mxu0
          %v495 = vpop.f32.mrf.mxu0
          %v496 = vadd.f32 0.0, %v495
          %v497 = vpop.f32.mrf.mxu0
          %498 = vdwg.mxu0
          %v499 = vpack.c.bf16 %v440, %v437
          %v500 = vpack.c.bf16 %v448, %v445
          %v501 = vpack.c.bf16 %v456, %v453
          %v502 = vpack.c.bf16 %v464, %v461
          %v503 = vpack.c.bf16 %v472, %v469
          %v504 = vpack.c.bf16 %v480, %v477
          %v505 = vpack.c.bf16 %v488, %v485
          %v506 = vpack.c.bf16 %v496, %v493
          %v507 = vld [vmem:[%s167] sm:$0xf]
          %v508 = vld [vmem:[%s167 + $0x4] sm:$0xf]
          %v509 = vld [vmem:[%s167 + $0x8] sm:$0xf]
          %v510 = vld [vmem:[%s167 + $0xc] sm:$0xf]
          %v511 = vld [vmem:[%s167 + $0x10] sm:$0xf]
          %v512 = vld [vmem:[%s167 + $0x14] sm:$0xf]
          %v513 = vld [vmem:[%s167 + $0x18] sm:$0xf]
          %v514 = vld [vmem:[%s167 + $0x1c] sm:$0xf]
          %v515 = vld [vmem:[%s167 + $0x20] sm:$0xf]
          %v516 = vld [vmem:[%s167 + $0x24] sm:$0xf]
          %v517 = vld [vmem:[%s167 + $0x28] sm:$0xf]
          %v518 = vld [vmem:[%s167 + $0x2c] sm:$0xf]
          %v519 = vld [vmem:[%s167 + $0x30] sm:$0xf]
          %v520 = vld [vmem:[%s167 + $0x34] sm:$0xf]
          %v521 = vld [vmem:[%s167 + $0x38] sm:$0xf]
          %v522 = vld [vmem:[%s167 + $0x3c] sm:$0xf]
          %v523 = vld [vmem:[%s193] sm:$0x1]
          %v525 = vlaneseq
          %v526 = vshrl.u32 %v525, 7
          %v527 = vsub.s32 0, %v526
          %v528 = vrot.slane %v523, %v527
          %v546 = vunpack.c.l.b16 %v507
          %v547 = vunpack.c.l.b16 %v508
          %v548 = vunpack.c.l.b16 %v509
          %v549 = vunpack.c.l.b16 %v510
          %v550 = vunpack.c.l.b16 %v511
          %v551 = vunpack.c.l.b16 %v512
          %v552 = vunpack.c.l.b16 %v513
          %v553 = vunpack.c.l.b16 %v514
          %v554 = vunpack.c.l.b16 %v515
          %v555 = vunpack.c.l.b16 %v516
          %v556 = vunpack.c.l.b16 %v517
          %v557 = vunpack.c.l.b16 %v518
          %v558 = vunpack.c.l.b16 %v519
          %v559 = vunpack.c.l.b16 %v520
          %v560 = vunpack.c.l.b16 %v521
          %v561 = vunpack.c.l.b16 %v522
          %v562 = vpack.c.b16 %v547, %v546
          %v563 = vpack.c.b16 %v549, %v548
          %v564 = vpack.c.b16 %v551, %v550
          %v565 = vpack.c.b16 %v553, %v552
          %v566 = vpack.c.b16 %v555, %v554
          %v567 = vpack.c.b16 %v557, %v556
          %v568 = vpack.c.b16 %v559, %v558
          %v569 = vpack.c.b16 %v561, %v560
          %578 = vmatprep.subr.bf16.mxu0 0
          %579 = vmatpush1.bf16.msra.mxu0 %v569
          %580 = vmatprep.subr.bf16.mxu0 0
          %581 = vmatpush1.bf16.msra.mxu0 %v568
          %582 = vmatprep.subr.bf16.mxu0 0
          %583 = vmatpush1.bf16.msra.mxu0 %v567
          %584 = vmatprep.subr.bf16.mxu0 0
          %585 = vmatpush1.bf16.msra.mxu0 %v566
          %586 = vmatprep.subr.bf16.mxu0 0
          %587 = vmatpush1.bf16.msra.mxu0 %v565
          %588 = vmatprep.subr.bf16.mxu0 0
          %589 = vmatpush1.bf16.msra.mxu0 %v564
          %590 = vmatprep.subr.bf16.mxu0 0
          %591 = vmatpush1.bf16.msra.mxu0 %v563
          %592 = vmatprep.subr.bf16.mxu0 0
          %593 = vmatpush1.bf16.msra.mxu0 %v562
          %594 = vmatprep.subr.bf16.mxu0 0
          %595 = vmatpush2.bf16.msra.mxu0 0
          %596 = vmatprep.subr.bf16.mxu0 0
          %597 = vmatpush2.bf16.msra.mxu0 0
          %598 = vmatprep.subr.bf16.mxu0 0
          %599 = vmatpush2.bf16.msra.mxu0 0
          %600 = vmatprep.subr.bf16.mxu0 0
          %601 = vmatpush2.bf16.msra.mxu0 0
          %602 = vmatprep.subr.bf16.mxu0 0
          %603 = vmatpush2.bf16.msra.mxu0 0
          %604 = vmatprep.subr.bf16.mxu0 0
          %605 = vmatpush2.bf16.msra.mxu0 0
          %606 = vmatprep.subr.bf16.mxu0 0
          %607 = vmatpush2.bf16.msra.mxu0 0
          %608 = vmatprep.subr.bf16.mxu0 0
          %609 = vmatpush2.bf16.msra.mxu0 0
          %610 = vmatprep.mubr.bf16.mxu0 0
          %611 = vmatmul.mubr.bf16.gmra.mxu0 %v499
          %v612 = vpop.f32.mrf.mxu0
          %v613 = vadd.f32 %v528, %v612
          %v614 = vpop.f32.mrf.mxu0
          %v615 = vpop.f32.mrf.mxu0
          %v616 = vadd.f32 %v528, %v615
          %v617 = vpop.f32.mrf.mxu0
          %618 = vmatprep.mubr.bf16.mxu0 0
          %619 = vmatmul.mubr.bf16.gmra.mxu0 %v500
          %v620 = vpop.f32.mrf.mxu0
          %v621 = vadd.f32 %v528, %v620
          %v622 = vpop.f32.mrf.mxu0
          %v623 = vpop.f32.mrf.mxu0
          %v624 = vadd.f32 %v528, %v623
          %v625 = vpop.f32.mrf.mxu0
          %626 = vmatprep.mubr.bf16.mxu0 0
          %627 = vmatmul.mubr.bf16.gmra.mxu0 %v501
          %v628 = vpop.f32.mrf.mxu0
          %v629 = vadd.f32 %v528, %v628
          %v630 = vpop.f32.mrf.mxu0
          %v631 = vpop.f32.mrf.mxu0
          %v632 = vadd.f32 %v528, %v631
          %v633 = vpop.f32.mrf.mxu0
          %634 = vmatprep.mubr.bf16.mxu0 0
          %635 = vmatmul.mubr.bf16.gmra.mxu0 %v502
          %v636 = vpop.f32.mrf.mxu0
          %v637 = vadd.f32 %v528, %v636
          %v638 = vpop.f32.mrf.mxu0
          %v639 = vpop.f32.mrf.mxu0
          %v640 = vadd.f32 %v528, %v639
          %v641 = vpop.f32.mrf.mxu0
          %642 = vmatprep.mubr.bf16.mxu0 0
          %643 = vmatmul.mubr.bf16.gmra.mxu0 %v503
          %v644 = vpop.f32.mrf.mxu0
          %v645 = vadd.f32 %v528, %v644
          %v646 = vpop.f32.mrf.mxu0
          %v647 = vpop.f32.mrf.mxu0
          %v648 = vadd.f32 %v528, %v647
          %v649 = vpop.f32.mrf.mxu0
          %650 = vmatprep.mubr.bf16.mxu0 0
          %651 = vmatmul.mubr.bf16.gmra.mxu0 %v504
          %v652 = vpop.f32.mrf.mxu0
          %v653 = vadd.f32 %v528, %v652
          %v654 = vpop.f32.mrf.mxu0
          %v655 = vpop.f32.mrf.mxu0
          %v656 = vadd.f32 %v528, %v655
          %v657 = vpop.f32.mrf.mxu0
          %658 = vmatprep.mubr.bf16.mxu0 0
          %659 = vmatmul.mubr.bf16.gmra.mxu0 %v505
          %v660 = vpop.f32.mrf.mxu0
          %v661 = vadd.f32 %v528, %v660
          %v662 = vpop.f32.mrf.mxu0
          %v663 = vpop.f32.mrf.mxu0
          %v664 = vadd.f32 %v528, %v663
          %v665 = vpop.f32.mrf.mxu0
          %666 = vmatprep.mubr.bf16.mxu0 0
          %667 = vmatmul.mubr.bf16.gmra.mxu0 %v506
          %v668 = vpop.f32.mrf.mxu0
          %v669 = vadd.f32 %v528, %v668
          %v670 = vpop.f32.mrf.mxu0
          %v671 = vpop.f32.mrf.mxu0
          %v672 = vadd.f32 %v528, %v671
          %v673 = vpop.f32.mrf.mxu0
          %674 = vdwg.mxu0
          %v675 = vmax.f32 %v613, 0.0
          %v676 = vmax.f32 %v616, 0.0
          %v677 = vmax.f32 %v621, 0.0
          %v678 = vmax.f32 %v624, 0.0
          %v679 = vmax.f32 %v629, 0.0
          %v680 = vmax.f32 %v632, 0.0
          %v681 = vmax.f32 %v637, 0.0
          %v682 = vmax.f32 %v640, 0.0
          %v683 = vmax.f32 %v645, 0.0
          %v684 = vmax.f32 %v648, 0.0
          %v685 = vmax.f32 %v653, 0.0
          %v686 = vmax.f32 %v656, 0.0
          %v687 = vmax.f32 %v661, 0.0
          %v688 = vmax.f32 %v664, 0.0
          %v689 = vmax.f32 %v669, 0.0
          %v690 = vmax.f32 %v672, 0.0
          %s691 = sadd.s32 %s225, %s198
          %v692 = vpack.c.bf16 %v676, %v675
          %v693 = vpack.c.bf16 %v678, %v677
          %v694 = vpack.c.bf16 %v680, %v679
          %v695 = vpack.c.bf16 %v682, %v681
          %v696 = vpack.c.bf16 %v684, %v683
          %v697 = vpack.c.bf16 %v686, %v685
          %v698 = vpack.c.bf16 %v688, %v687
          %v699 = vpack.c.bf16 %v690, %v689
          %v708 = vunpack.c.l.b16 %v692
          %v709 = vunpack.c.h.b16 %v692
          %v710 = vunpack.c.l.b16 %v693
          %v711 = vunpack.c.h.b16 %v693
          %v712 = vunpack.c.l.b16 %v694
          %v713 = vunpack.c.h.b16 %v694
          %v714 = vunpack.c.l.b16 %v695
          %v715 = vunpack.c.h.b16 %v695
          %v716 = vunpack.c.l.b16 %v696
          %v717 = vunpack.c.h.b16 %v696
          %v718 = vunpack.c.l.b16 %v697
          %v719 = vunpack.c.h.b16 %v697
          %v720 = vunpack.c.l.b16 %v698
          %v721 = vunpack.c.h.b16 %v698
          %v722 = vunpack.c.l.b16 %v699
          %v723 = vunpack.c.h.b16 %v699
          %v724 = vpack.c.b16 %v708, %v708
          %v725 = vpack.c.b16 %v709, %v709
          %v726 = vpack.c.b16 %v710, %v710
          %v727 = vpack.c.b16 %v711, %v711
          %v728 = vpack.c.b16 %v712, %v712
          %v729 = vpack.c.b16 %v713, %v713
          %v730 = vpack.c.b16 %v714, %v714
          %v731 = vpack.c.b16 %v715, %v715
          %v732 = vpack.c.b16 %v716, %v716
          %v733 = vpack.c.b16 %v717, %v717
          %v734 = vpack.c.b16 %v718, %v718
          %v735 = vpack.c.b16 %v719, %v719
          %v736 = vpack.c.b16 %v720, %v720
          %v737 = vpack.c.b16 %v721, %v721
          %v738 = vpack.c.b16 %v722, %v722
          %v739 = vpack.c.b16 %v723, %v723
          %s756 = sshra.s32 %s691, 3
          %s757 = sand.u32 %s691, 7
          %s758 = smul.addr %s756, 4
          %s759 = scalar_lea.vmem [#allocation2], %s758
          %760 = vst [vmem:[%s759] sm:$0xf] %v724
          %761 = vst [vmem:[%s759 + $0x4] sm:$0xf] %v725
          %762 = vst [vmem:[%s759 + $0x8] sm:$0xf] %v726
          %763 = vst [vmem:[%s759 + $0xc] sm:$0xf] %v727
          %764 = vst [vmem:[%s759 + $0x10] sm:$0xf] %v728
          %765 = vst [vmem:[%s759 + $0x14] sm:$0xf] %v729
          %766 = vst [vmem:[%s759 + $0x18] sm:$0xf] %v730
          %767 = vst [vmem:[%s759 + $0x1c] sm:$0xf] %v731
          %768 = vst [vmem:[%s759 + $0x20] sm:$0xf] %v732
          %769 = vst [vmem:[%s759 + $0x24] sm:$0xf] %v733
          %770 = vst [vmem:[%s759 + $0x28] sm:$0xf] %v734
          %771 = vst [vmem:[%s759 + $0x2c] sm:$0xf] %v735
          %772 = vst [vmem:[%s759 + $0x30] sm:$0xf] %v736
          %773 = vst [vmem:[%s759 + $0x34] sm:$0xf] %v737
          %774 = vst [vmem:[%s759 + $0x38] sm:$0xf] %v738
          %775 = vst [vmem:[%s759 + $0x3c] sm:$0xf] %v739
        $region48: #{tpu_custom_call.1} parent=27 // pred_fallthru
          _
        // Predicated region
        $region49: #{tpu_custom_call.1} parent=27 // pred_check
          %p776 = pneg %p226
        $region50: #{tpu_custom_call.1} parent=27 // pred_check_branch
          %778 = sbr.rel (%p776) target = $region52
        $region51: #{tpu_custom_call.1} parent=27 // pred_region
          %s779 = sadd.s32 %s211, %s198
          %s780 = sshra.s32 %s779, 3
          %s781 = sand.u32 %s779, 7
          %s782 = smul.addr %s780, 4
          %s783 = scalar_lea.vmem [#allocation2], %s782
          %v784 = vld [vmem:[%s783] sm:$0xf]
          %v785 = vld [vmem:[%s783 + $0x4] sm:$0xf]
          %v786 = vld [vmem:[%s783 + $0x8] sm:$0xf]
          %v787 = vld [vmem:[%s783 + $0xc] sm:$0xf]
          %v788 = vld [vmem:[%s783 + $0x10] sm:$0xf]
          %v789 = vld [vmem:[%s783 + $0x14] sm:$0xf]
          %v790 = vld [vmem:[%s783 + $0x18] sm:$0xf]
          %v791 = vld [vmem:[%s783 + $0x1c] sm:$0xf]
          %v792 = vld [vmem:[%s783 + $0x20] sm:$0xf]
          %v793 = vld [vmem:[%s783 + $0x24] sm:$0xf]
          %v794 = vld [vmem:[%s783 + $0x28] sm:$0xf]
          %v795 = vld [vmem:[%s783 + $0x2c] sm:$0xf]
          %v796 = vld [vmem:[%s783 + $0x30] sm:$0xf]
          %v797 = vld [vmem:[%s783 + $0x34] sm:$0xf]
          %v798 = vld [vmem:[%s783 + $0x38] sm:$0xf]
          %v799 = vld [vmem:[%s783 + $0x3c] sm:$0xf]
          %v800 = vld [vmem:[%s167] sm:$0xf]
          %v801 = vld [vmem:[%s167 + $0x4] sm:$0xf]
          %v802 = vld [vmem:[%s167 + $0x8] sm:$0xf]
          %v803 = vld [vmem:[%s167 + $0xc] sm:$0xf]
          %v804 = vld [vmem:[%s167 + $0x10] sm:$0xf]
          %v805 = vld [vmem:[%s167 + $0x14] sm:$0xf]
          %v806 = vld [vmem:[%s167 + $0x18] sm:$0xf]
          %v807 = vld [vmem:[%s167 + $0x1c] sm:$0xf]
          %v808 = vld [vmem:[%s167 + $0x20] sm:$0xf]
          %v809 = vld [vmem:[%s167 + $0x24] sm:$0xf]
          %v810 = vld [vmem:[%s167 + $0x28] sm:$0xf]
          %v811 = vld [vmem:[%s167 + $0x2c] sm:$0xf]
          %v812 = vld [vmem:[%s167 + $0x30] sm:$0xf]
          %v813 = vld [vmem:[%s167 + $0x34] sm:$0xf]
          %v814 = vld [vmem:[%s167 + $0x38] sm:$0xf]
          %v815 = vld [vmem:[%s167 + $0x3c] sm:$0xf]
          %v816 = vld [vmem:[%s193] sm:$0x1]
          %v818 = vlaneseq
          %v819 = vshrl.u32 %v818, 7
          %v820 = vsub.s32 0, %v819
          %v821 = vrot.slane %v816, %v820
          %v839 = vunpack.c.l.b16 %v784
          %v840 = vunpack.c.l.b16 %v785
          %v841 = vunpack.c.l.b16 %v786
          %v842 = vunpack.c.l.b16 %v787
          %v843 = vunpack.c.l.b16 %v788
          %v844 = vunpack.c.l.b16 %v789
          %v845 = vunpack.c.l.b16 %v790
          %v846 = vunpack.c.l.b16 %v791
          %v847 = vunpack.c.l.b16 %v792
          %v848 = vunpack.c.l.b16 %v793
          %v849 = vunpack.c.l.b16 %v794
          %v850 = vunpack.c.l.b16 %v795
          %v851 = vunpack.c.l.b16 %v796
          %v852 = vunpack.c.l.b16 %v797
          %v853 = vunpack.c.l.b16 %v798
          %v854 = vunpack.c.l.b16 %v799
          %v855 = vpack.c.b16 %v840, %v839
          %v856 = vpack.c.b16 %v842, %v841
          %v857 = vpack.c.b16 %v844, %v843
          %v858 = vpack.c.b16 %v846, %v845
          %v859 = vpack.c.b16 %v848, %v847
          %v860 = vpack.c.b16 %v850, %v849
          %v861 = vpack.c.b16 %v852, %v851
          %v862 = vpack.c.b16 %v854, %v853
          %v887 = vunpack.c.l.b16 %v800
          %v888 = vunpack.c.l.b16 %v801
          %v889 = vunpack.c.l.b16 %v802
          %v890 = vunpack.c.l.b16 %v803
          %v891 = vunpack.c.l.b16 %v804
          %v892 = vunpack.c.l.b16 %v805
          %v893 = vunpack.c.l.b16 %v806
          %v894 = vunpack.c.l.b16 %v807
          %v895 = vunpack.c.l.b16 %v808
          %v896 = vunpack.c.l.b16 %v809
          %v897 = vunpack.c.l.b16 %v810
          %v898 = vunpack.c.l.b16 %v811
          %v899 = vunpack.c.l.b16 %v812
          %v900 = vunpack.c.l.b16 %v813
          %v901 = vunpack.c.l.b16 %v814
          %v902 = vunpack.c.l.b16 %v815
          %v903 = vpack.c.b16 %v888, %v887
          %v904 = vpack.c.b16 %v890, %v889
          %v905 = vpack.c.b16 %v892, %v891
          %v906 = vpack.c.b16 %v894, %v893
          %v907 = vpack.c.b16 %v896, %v895
          %v908 = vpack.c.b16 %v898, %v897
          %v909 = vpack.c.b16 %v900, %v899
          %v910 = vpack.c.b16 %v902, %v901
          %919 = vmatprep.subr.bf16.mxu0 0
          %920 = vmatpush1.bf16.msra.mxu0 %v910
          %921 = vmatprep.subr.bf16.mxu0 0
          %922 = vmatpush1.bf16.msra.mxu0 %v909
          %923 = vmatprep.subr.bf16.mxu0 0
          %924 = vmatpush1.bf16.msra.mxu0 %v908
          %925 = vmatprep.subr.bf16.mxu0 0
          %926 = vmatpush1.bf16.msra.mxu0 %v907
          %927 = vmatprep.subr.bf16.mxu0 0
          %928 = vmatpush1.bf16.msra.mxu0 %v906
          %929 = vmatprep.subr.bf16.mxu0 0
          %930 = vmatpush1.bf16.msra.mxu0 %v905
          %931 = vmatprep.subr.bf16.mxu0 0
          %932 = vmatpush1.bf16.msra.mxu0 %v904
          %933 = vmatprep.subr.bf16.mxu0 0
          %934 = vmatpush1.bf16.msra.mxu0 %v903
          %935 = vmatprep.subr.bf16.mxu0 0
          %936 = vmatpush2.bf16.msra.mxu0 0
          %937 = vmatprep.subr.bf16.mxu0 0
          %938 = vmatpush2.bf16.msra.mxu0 0
          %939 = vmatprep.subr.bf16.mxu0 0
          %940 = vmatpush2.bf16.msra.mxu0 0
          %941 = vmatprep.subr.bf16.mxu0 0
          %942 = vmatpush2.bf16.msra.mxu0 0
          %943 = vmatprep.subr.bf16.mxu0 0
          %944 = vmatpush2.bf16.msra.mxu0 0
          %945 = vmatprep.subr.bf16.mxu0 0
          %946 = vmatpush2.bf16.msra.mxu0 0
          %947 = vmatprep.subr.bf16.mxu0 0
          %948 = vmatpush2.bf16.msra.mxu0 0
          %949 = vmatprep.subr.bf16.mxu0 0
          %950 = vmatpush2.bf16.msra.mxu0 0
          %951 = vmatprep.mubr.bf16.mxu0 0
          %952 = vmatmul.mubr.bf16.gmra.mxu0 %v855
          %v953 = vpop.f32.mrf.mxu0
          %v954 = vadd.f32 %v821, %v953
          %v955 = vpop.f32.mrf.mxu0
          %v956 = vpop.f32.mrf.mxu0
          %v957 = vadd.f32 %v821, %v956
          %v958 = vpop.f32.mrf.mxu0
          %959 = vmatprep.mubr.bf16.mxu0 0
          %960 = vmatmul.mubr.bf16.gmra.mxu0 %v856
          %v961 = vpop.f32.mrf.mxu0
          %v962 = vadd.f32 %v821, %v961
          %v963 = vpop.f32.mrf.mxu0
          %v964 = vpop.f32.mrf.mxu0
          %v965 = vadd.f32 %v821, %v964
          %v966 = vpop.f32.mrf.mxu0
          %967 = vmatprep.mubr.bf16.mxu0 0
          %968 = vmatmul.mubr.bf16.gmra.mxu0 %v857
          %v969 = vpop.f32.mrf.mxu0
          %v970 = vadd.f32 %v821, %v969
          %v971 = vpop.f32.mrf.mxu0
          %v972 = vpop.f32.mrf.mxu0
          %v973 = vadd.f32 %v821, %v972
          %v974 = vpop.f32.mrf.mxu0
          %975 = vmatprep.mubr.bf16.mxu0 0
          %976 = vmatmul.mubr.bf16.gmra.mxu0 %v858
          %v977 = vpop.f32.mrf.mxu0
          %v978 = vadd.f32 %v821, %v977
          %v979 = vpop.f32.mrf.mxu0
          %v980 = vpop.f32.mrf.mxu0
          %v981 = vadd.f32 %v821, %v980
          %v982 = vpop.f32.mrf.mxu0
          %983 = vmatprep.mubr.bf16.mxu0 0
          %984 = vmatmul.mubr.bf16.gmra.mxu0 %v859
          %v985 = vpop.f32.mrf.mxu0
          %v986 = vadd.f32 %v821, %v985
          %v987 = vpop.f32.mrf.mxu0
          %v988 = vpop.f32.mrf.mxu0
          %v989 = vadd.f32 %v821, %v988
          %v990 = vpop.f32.mrf.mxu0
          %991 = vmatprep.mubr.bf16.mxu0 0
          %992 = vmatmul.mubr.bf16.gmra.mxu0 %v860
          %v993 = vpop.f32.mrf.mxu0
          %v994 = vadd.f32 %v821, %v993
          %v995 = vpop.f32.mrf.mxu0
          %v996 = vpop.f32.mrf.mxu0
          %v997 = vadd.f32 %v821, %v996
          %v998 = vpop.f32.mrf.mxu0
          %999 = vmatprep.mubr.bf16.mxu0 0
          %1000 = vmatmul.mubr.bf16.gmra.mxu0 %v861
          %v1001 = vpop.f32.mrf.mxu0
          %v1002 = vadd.f32 %v821, %v1001
          %v1003 = vpop.f32.mrf.mxu0
          %v1004 = vpop.f32.mrf.mxu0
          %v1005 = vadd.f32 %v821, %v1004
          %v1006 = vpop.f32.mrf.mxu0
          %1007 = vmatprep.mubr.bf16.mxu0 0
          %1008 = vmatmul.mubr.bf16.gmra.mxu0 %v862
          %v1009 = vpop.f32.mrf.mxu0
          %v1010 = vadd.f32 %v821, %v1009
          %v1011 = vpop.f32.mrf.mxu0
          %v1012 = vpop.f32.mrf.mxu0
          %v1013 = vadd.f32 %v821, %v1012
          %v1014 = vpop.f32.mrf.mxu0
          %1015 = vdwg.mxu0
          %1016 = vst [vmem:[%s190] sm:$0xff] %v954
          %1017 = vst [vmem:[%s190 + $0x8] sm:$0xff] %v957
          %1018 = vst [vmem:[%s190 + $0x10] sm:$0xff] %v962
          %1019 = vst [vmem:[%s190 + $0x18] sm:$0xff] %v965
          %1020 = vst [vmem:[%s190 + $0x20] sm:$0xff] %v970
          %1021 = vst [vmem:[%s190 + $0x28] sm:$0xff] %v973
          %1022 = vst [vmem:[%s190 + $0x30] sm:$0xff] %v978
          %1023 = vst [vmem:[%s190 + $0x38] sm:$0xff] %v981
          %1024 = vst [vmem:[%s190 + $0x40] sm:$0xff] %v986
          %1025 = vst [vmem:[%s190 + $0x48] sm:$0xff] %v989
          %1026 = vst [vmem:[%s190 + $0x50] sm:$0xff] %v994
          %1027 = vst [vmem:[%s190 + $0x58] sm:$0xff] %v997
          %1028 = vst [vmem:[%s190 + $0x60] sm:$0xff] %v1002
          %1029 = vst [vmem:[%s190 + $0x68] sm:$0xff] %v1005
          %1030 = vst [vmem:[%s190 + $0x70] sm:$0xff] %v1010
          %1031 = vst [vmem:[%s190 + $0x78] sm:$0xff] %v1013
        $region52: #{tpu_custom_call.1} parent=27 // pred_fallthru
          _
        %s1032 = sand.u32 %s97, 1
        %s1033 = scalar_lea.sflag [#allocation7], %s1032
        %s1034 = sand.u32 %s97, 1
        %s1035 = smul.addr %s1034, 128
        %s1036 = scalar_lea.vmem [#allocation8], %s1035
        // Predicated region
        $region53: #{tpu_custom_call.1} parent=27 // pred_check
          %p1037 = pneg %p107
        $region54: #{tpu_custom_call.1} parent=27 // pred_check_branch
          %1039 = sbr.rel (%p1037) target = $region56
        $region55: #{tpu_custom_call.1} parent=27 // pred_region
          %p1040 = scmp.eq.s32.totalorder %s25, 2
          %s1041 = scalar_select %p1040, %s26, 0
          %s1042 = smul.u32 16, %s1041
          %s1044 = ssub.s32 2048, 2048
          %1045 = vsyncadd %s1033, %s1044
          %s1046 = smul.addr %s1042, 128
          %s1047 = scalar_lea.hbm %s4, %s1046
          %s1048 = sshll.u32 %s1036, 4
          %s1049 = int_to_ptr.vmem [resolvable:$true] %s1048
          %1054 = dma.vmem_to_hbm [thread:$0]  %s1049, 2048, %s1047, %s1033, 128, 128, 8
        $region56: #{tpu_custom_call.1} parent=27 // pred_fallthru
          _
      $region28: #{tpu_custom_call.1} parent=5 // pred_fallthru
        _
      %p1055 = scmp.le.s32.totalorder 2, %s16
      // Predicated region
      $region57: #{tpu_custom_call.1} parent=5 // pred_check
        %p1056 = pneg %p1055
      $region58: #{tpu_custom_call.1} parent=5 // pred_check_branch
        %1058 = sbr.rel (%p1056) target = $region60
      $region59: #{tpu_custom_call.1} parent=5 // pred_region
        %s1059 = ssub.s32 %s16, 2
        // Predicated region
        $region61: #{tpu_custom_call.1} parent=59 // pred_check
          %p1060 = pneg %p113
        $region62: #{tpu_custom_call.1} parent=59 // pred_check_branch
          %1062 = sbr.rel (%p1060) target = $region64
        $region63: #{tpu_custom_call.1} parent=59 // pred_region
          %s1063 = sand.u32 %s98, 1
          %s1064 = scalar_lea.sflag [#allocation7], %s1063
          %s1065 = sand.u32 %s98, 1
          %s1066 = smul.addr %s1065, 128
          %s1067 = scalar_lea.vmem [#allocation8], %s1066
          %1068 = dma.done %s1064, 2048
        $region64: #{tpu_custom_call.1} parent=59 // pred_fallthru
          _
      $region60: #{tpu_custom_call.1} parent=5 // pred_fallthru
        _
    $region6: #{tpu_custom_call.1} parent=1 // loop_footer
      %s20 = sadd.s32 1, %s16
    $region7: #{tpu_custom_call.1} parent=1 // loop_footer_branch
      %15 = sbr.rel target = $region3
    $region8: #{tpu_custom_call.1} parent=1 // loop_exit
      _
    %1069 = vsyncpa [#allocation6], 1
    %s1070 = scalar_lea.sflag [#allocation6], 1
    %1071 = vsyncpa %s1070, 1
    %1072 = vsyncpa [#allocation7], 1
    %s1073 = scalar_lea.sflag [#allocation7], 1
    %1074 = vsyncpa %s1073, 1
  %1075 = vsyncmov [#allocation4]
  %s1076 = vpop.sfrf %1075
  %p1077 = scmp.eq.s32.totalorder %s1076, 0
  %p1078 = pneg %p1077
  %1080 = shalt.err (%p1078)
  %s1081 = scalar_lea.sflag [#allocation4], 1
  %1082 = vsyncmov %s1081
  %s1083 = vpop.sfrf %1082
  %p1084 = scmp.eq.s32.totalorder %s1083, 0
  %p1085 = pneg %p1084
  %1087 = shalt.err (%p1085)

</llo_original>
